<compile_context>
chip_gen: v5e
topology: v5e:2x2
jax: 0.10.0
libtpu: 0.0.40
codegen_flags: <defaults>
</compile_context>

<pallas_src>
import jax
import jax.numpy as jnp
from jax.experimental import pallas as pl
from jax.experimental.pallas import tpu as pltpu

IN_FEATURES = 100
OUT_FEATURES = 20
DROP_P = 0.5
MAX_BLOCK_ROWS = 2048


def _round_up(n, m):
    return ((n + m - 1) // m) * m


def _linear_dropout_kernel(seed_ref, x_ref, wt_ref, b_ref, o_ref):
    # y = x @ W^T + b.  The 1/(1-p) dropout scale is already folded into
    # wt_ref / b_ref by prepare_params, so no per-element rescale is needed.
    y = jnp.dot(x_ref[...], wt_ref[...], preferred_element_type=jnp.float32)
    y = y + b_ref[...]

    tb, n = y.shape
    tile = pl.program_id(0)

    # Counter-based dropout mask: one xor-shift + one multiply; only the top
    # bit is consumed for p=0.5.  Scalar contributions (seed, tile row offset)
    # are pre-mixed on the scalar unit into a single additive constant.
    base = (seed_ref[0].astype(jnp.uint32) * jnp.uint32(0xC2B2AE3D)
            + (tile * tb).astype(jnp.uint32) * jnp.uint32(0x9E3779B1))
    row = jax.lax.broadcasted_iota(jnp.int32, (tb, n), 0).astype(jnp.uint32)
    col = jax.lax.broadcasted_iota(jnp.int32, (tb, n), 1).astype(jnp.uint32)
    h = row * jnp.uint32(0x9E3779B1) + col * jnp.uint32(0x85EBCA77) + base
    h = h ^ (h >> jnp.uint32(16))
    h = h * jnp.uint32(0x7FEB352D)
    keep = (h >> jnp.uint32(31)) == jnp.uint32(0)        # P(keep) = 0.5 exactly

    o_ref[...] = jnp.where(keep, y, 0.0).astype(o_ref.dtype)


def _linear_kernel(seed_ref, x_ref, wt_ref, b_ref, o_ref):
    # eval-mode path: dropout is the identity
    y = jnp.dot(x_ref[...], wt_ref[...], preferred_element_type=jnp.float32)
    o_ref[...] = (y + b_ref[...]).astype(o_ref.dtype)


def prepare_params(weight, bias, p=DROP_P):
    """PyTorch-layout params -> kernel-layout params, done ONCE at init.

    weight (20, 100), bias (20,) -> (wt, b2, wt_train, b2_train) with
    wt = weight.T (100, 20), b2 = (1, 20); the *_train copies are pre-scaled
    by 1/(1-p) so the dropout rescale costs nothing inside the kernel.
    """
    wt = jnp.asarray(weight, jnp.float32).T                        # (100, 20)
    b2 = jnp.asarray(bias, jnp.float32).reshape(1, OUT_FEATURES)   # (1, 20)
    scale = 1.0 / (1.0 - p)
    return wt, b2, wt * scale, b2 * scale


def dropout1_forward(x, params, seed, training=True, block_rows=MAX_BLOCK_ROWS):
    """x: (B, 100) f32, params: from prepare_params, seed: int32 scalar
    -> (B, 20) f32."""
    wt, b2, wt_train, b2_train = params
    B = x.shape[0]

    # Pad the batch only to a multiple of 8 sublanes (<= 7 extra rows).
    b8 = _round_up(B, 8)
    if b8 != B:
        x = jnp.pad(x, ((0, b8 - B), (0, 0)))

    # Batch tile: large tiles for pipelining, but at least 2 grid steps when
    # possible so v7x can shard the "parallel" axis across both TensorCores.
    tb = min(block_rows, b8)
    if 16 <= b8 <= block_rows:
        tb = _round_up(pl.cdiv(b8, 2), 8)
    grid = (pl.cdiv(b8, tb),)   # partial last tile handled by Pallas

    if training:
        kernel, w_arg, b_arg = _linear_dropout_kernel, wt_train, b2_train
    else:
        kernel, w_arg, b_arg = _linear_kernel, wt, b2

    seed_arr = jnp.asarray(seed, dtype=jnp.int32).reshape((1,))

    grid_spec = pltpu.PrefetchScalarGridSpec(
        num_scalar_prefetch=1,
        grid=grid,
        in_specs=[
            pl.BlockSpec((tb, IN_FEATURES), lambda i, seed: (i, 0)),
            pl.BlockSpec((IN_FEATURES, OUT_FEATURES), lambda i, seed: (0, 0)),
            pl.BlockSpec((1, OUT_FEATURES), lambda i, seed: (0, 0)),
        ],
        out_specs=pl.BlockSpec((tb, OUT_FEATURES), lambda i, seed: (i, 0)),
    )

    out = pl.pallas_call(
        kernel,
        out_shape=jax.ShapeDtypeStruct((b8, OUT_FEATURES), jnp.float32),
        grid_spec=grid_spec,
        compiler_params=pltpu.CompilerParams(
            dimension_semantics=("parallel",)),
    )(seed_arr, x, w_arg, b_arg)

    return out[:B]


if __name__ == "__main__":
    key = jax.random.PRNGKey(0)
    k_x, k_w, k_b = jax.random.split(key, 3)

    B = 8
    # Deterministic synthetic parameters (PyTorch-Linear-like uniform init range).
    bound = 1.0 / (IN_FEATURES ** 0.5)
    weight = jax.random.uniform(
        k_w, (OUT_FEATURES, IN_FEATURES), jnp.float32, -bound, bound)
    bias = jax.random.uniform(
        k_b, (OUT_FEATURES,), jnp.float32, -bound, bound)
    x = jax.random.normal(k_x, (B, IN_FEATURES), jnp.float32)

    # One-time parameter prep (transpose + train-path scale fold), hoisted
    # out of the forward path.
    params = prepare_params(weight, bias)
    seed = jnp.asarray(1234, dtype=jnp.int32)

    # Module default is training=True, so dropout is active.
    out = dropout1_forward(x, params, seed, training=True)
    out = jax.block_until_ready(out)

    assert out.shape == (B, OUT_FEATURES)
    ref = x @ weight.T + bias
    kept = out != 0.0
    expected = jnp.where(kept, 2.0 * ref, 0.0)
    assert jnp.allclose(out, expected, atol=1e-4, rtol=1e-4)
    # Dropout rate should be roughly 0.5 over 160 elements.
    frac_kept = jnp.mean(kept.astype(jnp.float32))
    assert 0.2 < float(frac_kept) < 0.8

    # Eval path: dropout is the identity.
    out_eval = dropout1_forward(x, params, seed, training=False)
    out_eval = jax.block_until_ready(out_eval)
    assert jnp.allclose(out_eval, ref, atol=1e-4, rtol=1e-4)

    print("KERNEL_OK")
</pallas_src>

<mosaic_0001>
module attributes {stable_mosaic.version = 11 : i64} {
  func.func @_linear_dropout_kernel(%arg0: i32, %arg1: memref<1xi32, #tpu.memory_space<smem>>, %arg2: memref<8x100xf32, #tpu.memory_space<vmem>>, %arg3: memref<100x20xf32, #tpu.memory_space<vmem>>, %arg4: memref<1x20xf32, #tpu.memory_space<vmem>>, %arg5: memref<8x20xf32, #tpu.memory_space<vmem>>) attributes {dimension_semantics = [#tpu.dimension_semantics<parallel>], iteration_bounds = array<i64: 1>, scalar_prefetch = 1 : i64, scratch_operands = 0 : i64, tpu.core_type = #tpu.core_type<tc>, window_params = [{transform_indices = @transform_0, window_bounds = array<i64: 8, 100>}, {pipeline_mode = #tpu.pipeline_mode<synchronous>, transform_indices = @transform_1, window_bounds = array<i64: 100, 20>}, {pipeline_mode = #tpu.pipeline_mode<synchronous>, transform_indices = @transform_2, window_bounds = array<i64: 1, 20>}, {transform_indices = @transform_3, window_bounds = array<i64: 8, 20>}]} {
    %c0 = arith.constant 0 : index
    %c0_0 = arith.constant 0 : index
    %0 = vector.load %arg2[%c0, %c0_0] : memref<8x100xf32, #tpu.memory_space<vmem>>, vector<8x100xf32>
    %c0_1 = arith.constant 0 : index
    %c0_2 = arith.constant 0 : index
    %1 = vector.load %arg3[%c0_1, %c0_2] : memref<100x20xf32, #tpu.memory_space<vmem>>, vector<100x20xf32>
    %cst = arith.constant dense<0.000000e+00> : vector<8x20xf32>
    %2 = tpu.matmul %0, %1, %cst {dimension_numbers = #tpu.dot_dimension_numbers<[1], [0], [0], [1], [0, 0, 1, 1], [], []>} : vector<8x100xf32>, vector<100x20xf32>, vector<8x20xf32> -> vector<8x20xf32>
    %c0_3 = arith.constant 0 : index
    %c0_4 = arith.constant 0 : index
    %3 = vector.load %arg4[%c0_3, %c0_4] : memref<1x20xf32, #tpu.memory_space<vmem>>, vector<1x20xf32>
    %4 = vector.broadcast %3 : vector<1x20xf32> to vector<8x20xf32>
    %5 = arith.addf %2, %4 : vector<8x20xf32>
    %c0_5 = arith.constant 0 : index
    %6 = memref.load %arg1[%c0_5] : memref<1xi32, #tpu.memory_space<smem>>
    %c-1028477379_i32 = arith.constant -1028477379 : i32
    %7 = arith.muli %6, %c-1028477379_i32 : i32
    %c8_i32 = arith.constant 8 : i32
    %8 = arith.muli %arg0, %c8_i32 : i32
    %c-1640531535_i32 = arith.constant -1640531535 : i32
    %9 = arith.muli %8, %c-1640531535_i32 : i32
    %10 = arith.addi %7, %9 : i32
    %11 = tpu.iota {dimensions = array<i32: 0>} : vector<8x20xi32>
    %12 = tpu.iota {dimensions = array<i32: 1>} : vector<8x20xi32>
    %c-1640531535_i32_6 = arith.constant -1640531535 : i32
    %13 = vector.broadcast %c-1640531535_i32_6 : i32 to vector<8x20xi32>
    %14 = arith.muli %11, %13 : vector<8x20xi32>
    %c-2048144777_i32 = arith.constant -2048144777 : i32
    %15 = vector.broadcast %c-2048144777_i32 : i32 to vector<8x20xi32>
    %16 = arith.muli %12, %15 : vector<8x20xi32>
    %17 = arith.addi %14, %16 : vector<8x20xi32>
    %18 = vector.broadcast %10 : i32 to vector<8x20xi32>
    %19 = arith.addi %17, %18 : vector<8x20xi32>
    %c16_i32 = arith.constant 16 : i32
    %20 = vector.broadcast %c16_i32 : i32 to vector<8x20xi32>
    %21 = arith.shrui %19, %20 : vector<8x20xi32>
    %22 = arith.xori %19, %21 : vector<8x20xi32>
    %c2146121005_i32 = arith.constant 2146121005 : i32
    %23 = vector.broadcast %c2146121005_i32 : i32 to vector<8x20xi32>
    %24 = arith.muli %22, %23 : vector<8x20xi32>
    %c31_i32 = arith.constant 31 : i32
    %25 = vector.broadcast %c31_i32 : i32 to vector<8x20xi32>
    %26 = arith.shrui %24, %25 : vector<8x20xi32>
    %c0_i32 = arith.constant 0 : i32
    %27 = vector.broadcast %c0_i32 : i32 to vector<8x20xi32>
    %28 = arith.cmpi eq, %26, %27 : vector<8x20xi32>
    %cst_7 = arith.constant 0.000000e+00 : f32
    %29 = vector.broadcast %cst_7 : f32 to vector<8x20xf32>
    %30 = arith.select %28, %5, %29 : vector<8x20xi1>, vector<8x20xf32>
    %c0_8 = arith.constant 0 : index
    %c0_9 = arith.constant 0 : index
    %31 = vector.load %arg5[%c0_8, %c0_9] : memref<8x20xf32, #tpu.memory_space<vmem>>, vector<8x20xf32>
    tpu.vector_store %arg5[%c0_8, %c0_9], %30 {strides = array<i32>} : memref<8x20xf32, #tpu.memory_space<vmem>>, vector<8x20xf32>,
    return
  }
  func.func @transform_0(%arg0: i32, %arg1: memref<1xi32, #tpu.memory_space<smem>>) -> (i32, i32) {
    %c0_i32 = arith.constant 0 : i32
    %c0_i32_0 = arith.constant 0 : i32
    return %arg0, %c0_i32 : i32, i32
  }
  func.func @transform_1(%arg0: i32, %arg1: memref<1xi32, #tpu.memory_space<smem>>) -> (i32, i32) {
    %c0_i32 = arith.constant 0 : i32
    %c0_i32_0 = arith.constant 0 : i32
    %c0_i32_1 = arith.constant 0 : i32
    return %c0_i32, %c0_i32_0 : i32, i32
  }
  func.func @transform_2(%arg0: i32, %arg1: memref<1xi32, #tpu.memory_space<smem>>) -> (i32, i32) {
    %c0_i32 = arith.constant 0 : i32
    %c0_i32_0 = arith.constant 0 : i32
    %c0_i32_1 = arith.constant 0 : i32
    return %c0_i32, %c0_i32_0 : i32, i32
  }
  func.func @transform_3(%arg0: i32, %arg1: memref<1xi32, #tpu.memory_space<smem>>) -> (i32, i32) {
    %c0_i32 = arith.constant 0 : i32
    %c0_i32_0 = arith.constant 0 : i32
    return %arg0, %c0_i32 : i32, i32
  }
}

</mosaic_0001>

<llo_original>
// kernel: tpu_custom_call.1
$region0: #{tpu_custom_call.1}
  #allocation0 [shape = 'u32[]', space=smem, size = 0x4, offset = 0x4, fixed_abs, tag = 'smem constant byte address 0x4 - core index']
  #allocation1 [shape = 'u32[72,128]{1,0:T(1,128)}', space=vmem, size = 0x9000, scoped, tag = 'internal scratch']
  #allocation2 [shape = 's32[1]{0}', space=sflag, size = 0x4, scoped, tag = 'scoped memory for tpu_custom_call.1']
  #allocation3 [shape = 's32[1]{0:T(128)S(6)}', space=smem, size = 0x200, scoped, tag = 'prefetched SMEM operand 0']
  %s0 = inlined_call_operand.<no memory space> [shape: s32[1], index: 0, kind: input, shape index: {}]
  %s1 = inlined_call_operand.vmem [shape: f32[8,100], index: 1, kind: input, shape index: {}]
  %s2 = inlined_call_operand.vmem [shape: f32[100,20], index: 2, kind: input, shape index: {}]
  %s3 = inlined_call_operand.vmem [shape: f32[1,20], index: 3, kind: input, shape index: {}]
  %s4 = inlined_call_operand.hbm [shape: f32[8,20], index: 4, kind: output, shape index: {}]
  %s5 = sld [smem:[#allocation0]]
  $region22: #{tpu_custom_call.1} parent=0
    _
  %s7 = ssub.s32 1, %s5
  %s8 = scalar_select 0, %s7, %s5
  %9 = sst [smem:[#allocation3]] %s0
  $region1: #{tpu_custom_call.1} parent=0
    #allocation4 [shape = 'u8[4096]{0}', space=vmem, size = 0x1000, scoped, tag = 'output window, operand 0, single buffered']
    #allocation5 [shape = 's32[1]{0}', space=sflag, size = 0x4, scoped, tag = 'scoped memory for tpu_custom_call.1']
    %10 = vsyncpa [#allocation5], 0
    // Predicated region
    $region2: #{tpu_custom_call.1} parent=1 // pred_check
      _
    $region3: #{tpu_custom_call.1} parent=1 // pred_check_branch
      %12 = sbr.rel (0) target = $region5
    $region4: #{tpu_custom_call.1} parent=1 // pred_region
      _
    $region5: #{tpu_custom_call.1} parent=1 // pred_fallthru
      _
    // Predicated region
    $region6: #{tpu_custom_call.1} parent=1 // pred_check
      _
    $region7: #{tpu_custom_call.1} parent=1 // pred_check_branch
      %14 = sbr.rel (0) target = $region9
    $region8: #{tpu_custom_call.1} parent=1 // pred_region
      _
    $region9: #{tpu_custom_call.1} parent=1 // pred_fallthru
      _
    // Predicated region
    $region10: #{tpu_custom_call.1} parent=1 // pred_check
      _
    $region11: #{tpu_custom_call.1} parent=1 // pred_check_branch
      %16 = sbr.rel (0) target = $region13
    $region12: #{tpu_custom_call.1} parent=1 // pred_region
      _
    $region13: #{tpu_custom_call.1} parent=1 // pred_fallthru
      _
    %v17 = vld [vmem:[%s1] sm:$0xff]
    %v18 = vld [vmem:[%s2] sm:$0xff]
    %v19 = vld [vmem:[%s2 + $0x8] sm:$0xff]
    %v20 = vld [vmem:[%s2 + $0x10] sm:$0xff]
    %v21 = vld [vmem:[%s2 + $0x18] sm:$0xff]
    %v22 = vld [vmem:[%s2 + $0x20] sm:$0xff]
    %v23 = vld [vmem:[%s2 + $0x28] sm:$0xff]
    %v24 = vld [vmem:[%s2 + $0x30] sm:$0xff]
    %v25 = vld [vmem:[%s2 + $0x38] sm:$0xff]
    %v26 = vld [vmem:[%s2 + $0x40] sm:$0xff]
    %v27 = vld [vmem:[%s2 + $0x48] sm:$0xff]
    %v28 = vld [vmem:[%s2 + $0x50] sm:$0xff]
    %v29 = vld [vmem:[%s2 + $0x58] sm:$0xff]
    %v30 = vld [vmem:[%s2 + $0x60] sm:$0xf]
    %v31 = vld [vmem:[%s3] sm:$0x1]
    %v33 = vperm.slane %v31, 0
    %vm35 = vcmask 818176
    %v37 = vsel %vm35, %v17, 0
    %vm39 = vcmask 1043456
    %v41 = vsel %vm39, %v30, 0
    %43 = vmatpush.msra.mxu0 0.0
    %44 = vmatpush.msra.mxu0 0.0
    %45 = vmatpush.msra.mxu0 0.0
    %46 = vmatpush.msra.mxu0 %v41
    %47 = vmatpush.msra.mxu0 %v29
    %48 = vmatpush.msra.mxu0 %v28
    %49 = vmatpush.msra.mxu0 %v27
    %50 = vmatpush.msra.mxu0 %v26
    %51 = vmatpush.msra.mxu0 %v25
    %52 = vmatpush.msra.mxu0 %v24
    %53 = vmatpush.msra.mxu0 %v23
    %54 = vmatpush.msra.mxu0 %v22
    %55 = vmatpush.msra.mxu0 %v21
    %56 = vmatpush.msra.mxu0 %v20
    %57 = vmatpush.msra.mxu0 %v19
    %58 = vmatpush.msra.mxu0 %v18
    %59 = vmatmul.f32.gmra.mxu0 %v37
    %v60 = vpop.f32.mrf.mxu0
    %v61 = vadd.f32 %v33, %v60
    %62 = vdwg.mxu0
    %s63 = sld [smem:[#allocation3]]
    %s64 = smul.u32 %s63, 3266489917
    %s65 = smul.u32 0, 4055616904
    %s66 = sadd.s32 %s64, %s65
    %v67 = vlaneseq
    %v68 = vshrl.u32 %v67, 7
    %v69 = vlaneseq
    %v70 = vand.u32 %v69, 127
    %v71 = vmul.u32 %v68, 2654435761
    %v72 = vmul.u32 %v70, 2246822519
    %v73 = vadd.s32 %v71, %v72
    %v74 = vstv %s66
    %v75 = vadd.s32 %v73, %v74
    %v76 = vshrl.u32 %v75, 16
    %v77 = vxor.u32 %v75, %v76
    %v78 = vmul.u32 %v77, 2146121005
    %v79 = vshrl.u32 %v78, 31
    %vm80 = vcmp.eq.s32.totalorder %v79, 0
    %v81 = vsel %vm80, %v61, 0.0
    %vm82 = vcmask 162816
    %83 = vst.msk [vmem:[#allocation4] sm:$0xff] %vm82, %v81
    // Predicated region
    $region14: #{tpu_custom_call.1} parent=1 // pred_check
      _
    $region15: #{tpu_custom_call.1} parent=1 // pred_check_branch
      %85 = sbr.rel (0) target = $region17
    $region16: #{tpu_custom_call.1} parent=1 // pred_region
      %87 = vsyncadd [#allocation5], 0
      %s89 = sshll.u32 [#allocation4], 4
      %s90 = int_to_ptr.vmem [resolvable:$true] %s89
      %s91 = sshll.u32 %s4, 4
      %s92 = int_to_ptr.hbm [resolvable:$true] %s91
      %94 = dma.vmem_to_hbm [thread:$0]  %s90, 128, %s92, [#allocation5]
    $region17: #{tpu_custom_call.1} parent=1 // pred_fallthru
      _
    // Predicated region
    $region18: #{tpu_custom_call.1} parent=1 // pred_check
      _
    $region19: #{tpu_custom_call.1} parent=1 // pred_check_branch
      %96 = sbr.rel (0) target = $region21
    $region20: #{tpu_custom_call.1} parent=1 // pred_region
      %98 = dma.done [#allocation5], 128
    $region21: #{tpu_custom_call.1} parent=1 // pred_fallthru
      _
    %99 = vsyncpa [#allocation5], 1

</llo_original>
